<compile_context>
chip_gen: v5e
topology: v5e:2x2
jax: 0.10.0
libtpu: 0.0.40
codegen_flags: <defaults>
</compile_context>

<pallas_src>
import jax
import jax.numpy as jnp
from jax.experimental import pallas as pl
from jax.experimental.pallas import tpu as pltpu

# DASH init_w for the default (non-MCM) model.
INIT_W = [0.2024, 0.5967, 0.1255, 0.6039, -0.1485, 0.572, 0.0933, 0.4801, 0.787]

_FEATURES = 8
_SAMPLES_PER_ROW = 16          # 16 samples x 8 features = 128 lanes per row


def dash_kernel(bias_ref, w_ref, x_ref, o_ref):
    # bias_ref: SMEM (1,)       f32
    # w_ref:    VMEM (128, 16)  f32  block-diagonal weights
    # x_ref:    VMEM (TR, 128)  f32  16 samples per row, features interleaved
    # o_ref:    VMEM (TR, 16)   f32
    y = jnp.log1p(x_ref[...])                                  # EUP
    z = jnp.dot(y, w_ref[...],
                preferred_element_type=jnp.float32,
                precision=jax.lax.Precision.HIGHEST)           # MXU, fp32 passes
    z = z + bias_ref[0]
    # Exact sigmoid (exp on EUP, full-precision divide).
    o_ref[...] = 1.0 / (1.0 + jnp.exp(-z))


def _pick_tile_rows(n_rows, *, max_tile_rows=32768, min_tile_rows=1024,
                    target_tiles=8):
    """Row-tile so each grid step moves O(10 MiB) of HBM while still giving
    enough tiles to feed both v7x TensorCores."""
    if n_rows <= min_tile_rows:
        return n_rows                        # single full-array block
    tr = pl.cdiv(n_rows, target_tiles)
    tr = max(min_tile_rows, min(max_tile_rows, tr))
    tr = ((tr + 7) // 8) * 8                 # (8, 128) sublane alignment
    return min(tr, n_rows)


def dash_forward(x, weight, bias, *, max_tile_rows=32768):
    """x: (B, 8) f32; weight: (1, 8) f32 (torch nn.Linear layout); bias: (1,).

    Returns (B, 1) f32, matching the PyTorch module's output.
    """
    B, F = x.shape
    assert F == _FEATURES
    x = x.astype(jnp.float32)

    # Pad B up to a multiple of 16 so the zero-copy (B/16, 128) view exists.
    # Feed B as a multiple of 16 on perf-critical paths: then this is a no-op
    # and the only HBM traffic is the kernel's own ~36 B/sample.
    b_pad = pl.cdiv(B, _SAMPLES_PER_ROW) * _SAMPLES_PER_ROW
    if b_pad != B:
        x = jnp.pad(x, ((0, b_pad - B), (0, 0)))
    n_rows = b_pad // _SAMPLES_PER_ROW
    x_r = x.reshape(n_rows, _SAMPLES_PER_ROW * _FEATURES)      # zero-copy view

    # Block-diagonal weights: Wbig[c, c // 8] = w[c % 8]  -> (128, 16).
    w = weight.reshape(_FEATURES).astype(jnp.float32)
    wbig = jnp.kron(jnp.eye(_SAMPLES_PER_ROW, dtype=jnp.float32),
                    w.reshape(_FEATURES, 1))
    bias_smem = bias.reshape(1).astype(jnp.float32)

    tr = _pick_tile_rows(n_rows, max_tile_rows=max_tile_rows)
    n_tiles = pl.cdiv(n_rows, tr)

    out = pl.pallas_call(
        dash_kernel,
        out_shape=jax.ShapeDtypeStruct((n_rows, _SAMPLES_PER_ROW), jnp.float32),
        grid=(n_tiles,),
        in_specs=[
            pl.BlockSpec(memory_space=pltpu.MemorySpace.SMEM),        # bias
            pl.BlockSpec((128, _SAMPLES_PER_ROW), lambda i: (0, 0)),  # Wbig
            pl.BlockSpec((tr, 128), lambda i: (i, 0)),                # x tile
        ],
        out_specs=pl.BlockSpec((tr, _SAMPLES_PER_ROW), lambda i: (i, 0)),
        compiler_params=pltpu.CompilerParams(
            dimension_semantics=("parallel",),
            vmem_limit_bytes=48 * 1024 * 1024),
        cost_estimate=pl.CostEstimate(
            flops=2 * n_rows * 128 * _SAMPLES_PER_ROW,
            transcendentals=(128 + _SAMPLES_PER_ROW) * n_rows,
            bytes_accessed=(128 + _SAMPLES_PER_ROW) * 4 * n_rows),
    )(bias_smem, wbig, x_r)

    # (n_rows, 16) row-major == (b_pad,) in sample order: free reshape, drop
    # padding, restore the module's (B, 1) output shape.
    return out.reshape(b_pad)[:B].reshape(B, 1)


if __name__ == "__main__":
    key = jax.random.PRNGKey(0)
    k1, k2 = jax.random.split(key)

    weight = jnp.array([INIT_W[:8]], dtype=jnp.float32)   # (1, 8)
    bias = jnp.array([INIT_W[8]], dtype=jnp.float32)      # (1,)

    def ref_fn(x):
        return jax.nn.sigmoid(
            jnp.dot(jnp.log1p(x), weight.T,
                    precision=jax.lax.Precision.HIGHEST) + bias)

    # Case 1: batch divisible by 16 (zero-copy fast path).
    x1 = jax.random.uniform(k1, (32, 8), dtype=jnp.float32) * 10.0
    out1 = jax.block_until_ready(dash_forward(x1, weight, bias))
    assert out1.shape == (32, 1)
    assert jnp.max(jnp.abs(out1 - ref_fn(x1))) < 2e-5

    # Case 2: ragged batch (exercises the small pad + slice path).
    x2 = jax.random.uniform(k2, (50, 8), dtype=jnp.float32) * 10.0
    out2 = jax.block_until_ready(dash_forward(x2, weight, bias))
    assert out2.shape == (50, 1)
    assert jnp.max(jnp.abs(out2 - ref_fn(x2))) < 2e-5

    print("KERNEL_OK")
</pallas_src>

<mosaic_0001>
module attributes {stable_mosaic.version = 11 : i64} {
  func.func @dash_kernel(%arg0: i32, %arg1: memref<1xf32, #tpu.memory_space<smem>>, %arg2: memref<128x16xf32, #tpu.memory_space<vmem>>, %arg3: memref<2x128xf32, #tpu.memory_space<vmem>>, %arg4: memref<2x16xf32, #tpu.memory_space<vmem>>) attributes {dimension_semantics = [#tpu.dimension_semantics<parallel>], iteration_bounds = array<i64: 1>, scalar_prefetch = 0 : i64, scratch_operands = 0 : i64, tpu.core_type = #tpu.core_type<tc>, window_params = [{transform_indices = @transform_0, window_bounds = array<i64: 1>}, {pipeline_mode = #tpu.pipeline_mode<synchronous>, transform_indices = @transform_1, window_bounds = array<i64: 128, 16>}, {transform_indices = @transform_2, window_bounds = array<i64: 2, 128>}, {transform_indices = @transform_3, window_bounds = array<i64: 2, 16>}]} {
    %c0 = arith.constant 0 : index
    %c0_0 = arith.constant 0 : index
    %0 = vector.load %arg3[%c0, %c0_0] : memref<2x128xf32, #tpu.memory_space<vmem>>, vector<2x128xf32>
    %1 = math.log1p %0 : vector<2x128xf32>
    %c0_1 = arith.constant 0 : index
    %c0_2 = arith.constant 0 : index
    %2 = vector.load %arg2[%c0_1, %c0_2] : memref<128x16xf32, #tpu.memory_space<vmem>>, vector<128x16xf32>
    %cst = arith.constant dense<0.000000e+00> : vector<2x16xf32>
    %3 = tpu.matmul %1, %2, %cst {dimension_numbers = #tpu.dot_dimension_numbers<[1], [0], [0], [1], [0, 0, 1, 1], [], []>, precision = #tpu.contract_precision<fp32>} : vector<2x128xf32>, vector<128x16xf32>, vector<2x16xf32> -> vector<2x16xf32>
    %c0_3 = arith.constant 0 : index
    %4 = memref.load %arg1[%c0_3] : memref<1xf32, #tpu.memory_space<smem>>
    %5 = vector.broadcast %4 : f32 to vector<2x16xf32>
    %6 = arith.addf %3, %5 : vector<2x16xf32>
    %cst_4 = arith.constant 0.000000e+00 : f32
    %7 = vector.broadcast %cst_4 : f32 to vector<2x16xf32>
    %8 = arith.subf %7, %6 : vector<2x16xf32>
    %9 = math.exp %8 : vector<2x16xf32>
    %cst_5 = arith.constant 1.000000e+00 : f32
    %10 = vector.broadcast %cst_5 : f32 to vector<2x16xf32>
    %11 = arith.addf %10, %9 : vector<2x16xf32>
    %cst_6 = arith.constant 1.000000e+00 : f32
    %12 = vector.broadcast %cst_6 : f32 to vector<2x16xf32>
    %13 = arith.divf %12, %11 : vector<2x16xf32>
    %c0_7 = arith.constant 0 : index
    %c0_8 = arith.constant 0 : index
    %14 = vector.load %arg4[%c0_7, %c0_8] : memref<2x16xf32, #tpu.memory_space<vmem>>, vector<2x16xf32>
    tpu.vector_store %arg4[%c0_7, %c0_8], %13 {strides = array<i32>} : memref<2x16xf32, #tpu.memory_space<vmem>>, vector<2x16xf32>,
    return
  }
  func.func @transform_0(%arg0: i32) -> i32 {
    %c0_i32 = arith.constant 0 : i32
    %c0_i32_0 = arith.constant 0 : i32
    return %c0_i32 : i32
  }
  func.func @transform_1(%arg0: i32) -> (i32, i32) {
    %c0_i32 = arith.constant 0 : i32
    %c0_i32_0 = arith.constant 0 : i32
    %c0_i32_1 = arith.constant 0 : i32
    return %c0_i32, %c0_i32_0 : i32, i32
  }
  func.func @transform_2(%arg0: i32) -> (i32, i32) {
    %c0_i32 = arith.constant 0 : i32
    %c0_i32_0 = arith.constant 0 : i32
    return %arg0, %c0_i32 : i32, i32
  }
  func.func @transform_3(%arg0: i32) -> (i32, i32) {
    %c0_i32 = arith.constant 0 : i32
    %c0_i32_0 = arith.constant 0 : i32
    return %arg0, %c0_i32 : i32, i32
  }
}

</mosaic_0001>

<llo_original>
// kernel: tpu_custom_call.1
$region0: #{tpu_custom_call.1}
  #allocation0 [shape = 'u32[]', space=smem, size = 0x4, offset = 0x4, fixed_abs, tag = 'smem constant byte address 0x4 - core index']
  #allocation1 [shape = 'u32[72,128]{1,0:T(1,128)}', space=vmem, size = 0x9000, scoped, tag = 'internal scratch']
  #allocation2 [shape = 'f32[1]{0:T(128)S(6)}', space=smem, size = 0x200, scoped, tag = 'scoped memory for tpu_custom_call.1']
  %s0 = inlined_call_operand.<no memory space> [shape: f32[1], index: 0, kind: input, shape index: {}]
  %s1 = inlined_call_operand.vmem [shape: f32[128,16], index: 1, kind: input, shape index: {}]
  %s2 = inlined_call_operand.vmem [shape: f32[2,128], index: 2, kind: input, shape index: {}]
  %s3 = inlined_call_operand.hbm [shape: f32[2,16], index: 3, kind: output, shape index: {}]
  %s4 = sld [smem:[#allocation0]]
  $region22: #{tpu_custom_call.1} parent=0
    _
  %s6 = ssub.s32 1, %s4
  %s7 = scalar_select 0, %s6, %s4
  %8 = sst [smem:[#allocation2]] %s0
  $region1: #{tpu_custom_call.1} parent=0
    #allocation3 [shape = 'u8[1024]{0}', space=vmem, size = 0x400, scoped, tag = 'output window, operand 0, single buffered']
    #allocation4 [shape = 's32[1]{0}', space=sflag, size = 0x4, scoped, tag = 'scoped memory for tpu_custom_call.1']
    %9 = vsyncpa [#allocation4], 0
    // Predicated region
    $region2: #{tpu_custom_call.1} parent=1 // pred_check
      _
    $region3: #{tpu_custom_call.1} parent=1 // pred_check_branch
      %11 = sbr.rel (0) target = $region5
    $region4: #{tpu_custom_call.1} parent=1 // pred_region
      _
    $region5: #{tpu_custom_call.1} parent=1 // pred_fallthru
      _
    // Predicated region
    $region6: #{tpu_custom_call.1} parent=1 // pred_check
      _
    $region7: #{tpu_custom_call.1} parent=1 // pred_check_branch
      %13 = sbr.rel (0) target = $region9
    $region8: #{tpu_custom_call.1} parent=1 // pred_region
      _
    $region9: #{tpu_custom_call.1} parent=1 // pred_fallthru
      _
    // Predicated region
    $region10: #{tpu_custom_call.1} parent=1 // pred_check
      _
    $region11: #{tpu_custom_call.1} parent=1 // pred_check_branch
      %15 = sbr.rel (0) target = $region13
    $region12: #{tpu_custom_call.1} parent=1 // pred_region
      _
    $region13: #{tpu_custom_call.1} parent=1 // pred_fallthru
      _
    %v16 = vld [vmem:[%s2] sm:$0x3]
    %v17 = vadd.f32 %v16, 1.0
    %v18 = vlog2.pop %v17
    %v19 = vmul.f32 %v18, 0.6931472
    %v20 = vmul.f32 -0.5, %v16
    %v21 = vadd.f32 %v20, 1.0
    %v22 = vmul.f32 %v21, %v16
    %v23 = vand.u32 2147483647, %v16
    %vm24 = vcmp.lt.f32.partialorder %v23, 0.0004427343
    %v25 = vsel %vm24, %v22, %v19
    %v26 = vld [vmem:[%s1] sm:$0xff]
    %v27 = vld [vmem:[%s1 + $0x8] sm:$0xff]
    %v28 = vld [vmem:[%s1 + $0x10] sm:$0xff]
    %v29 = vld [vmem:[%s1 + $0x18] sm:$0xff]
    %v30 = vld [vmem:[%s1 + $0x20] sm:$0xff]
    %v31 = vld [vmem:[%s1 + $0x28] sm:$0xff]
    %v32 = vld [vmem:[%s1 + $0x30] sm:$0xff]
    %v33 = vld [vmem:[%s1 + $0x38] sm:$0xff]
    %v34 = vld [vmem:[%s1 + $0x40] sm:$0xff]
    %v35 = vld [vmem:[%s1 + $0x48] sm:$0xff]
    %v36 = vld [vmem:[%s1 + $0x50] sm:$0xff]
    %v37 = vld [vmem:[%s1 + $0x58] sm:$0xff]
    %v38 = vld [vmem:[%s1 + $0x60] sm:$0xff]
    %v39 = vld [vmem:[%s1 + $0x68] sm:$0xff]
    %v40 = vld [vmem:[%s1 + $0x70] sm:$0xff]
    %v41 = vld [vmem:[%s1 + $0x78] sm:$0xff]
    %s42 = sld [smem:[#allocation2]]
    %v43 = vstv %s42
    %v44 = vand.u32 %v41, 4294901760
    %45 = vmatpush.msra.mxu0 %v44
    %v46 = vand.u32 %v40, 4294901760
    %47 = vmatpush.msra.mxu0 %v46
    %v48 = vand.u32 %v39, 4294901760
    %49 = vmatpush.msra.mxu0 %v48
    %v50 = vand.u32 %v38, 4294901760
    %51 = vmatpush.msra.mxu0 %v50
    %v52 = vand.u32 %v37, 4294901760
    %53 = vmatpush.msra.mxu0 %v52
    %v54 = vand.u32 %v36, 4294901760
    %55 = vmatpush.msra.mxu0 %v54
    %v56 = vand.u32 %v35, 4294901760
    %57 = vmatpush.msra.mxu0 %v56
    %v58 = vand.u32 %v34, 4294901760
    %59 = vmatpush.msra.mxu0 %v58
    %v60 = vand.u32 %v33, 4294901760
    %61 = vmatpush.msra.mxu0 %v60
    %v62 = vand.u32 %v32, 4294901760
    %63 = vmatpush.msra.mxu0 %v62
    %v64 = vand.u32 %v31, 4294901760
    %65 = vmatpush.msra.mxu0 %v64
    %v66 = vand.u32 %v30, 4294901760
    %67 = vmatpush.msra.mxu0 %v66
    %v68 = vand.u32 %v29, 4294901760
    %69 = vmatpush.msra.mxu0 %v68
    %v70 = vand.u32 %v28, 4294901760
    %71 = vmatpush.msra.mxu0 %v70
    %v72 = vand.u32 %v27, 4294901760
    %73 = vmatpush.msra.mxu0 %v72
    %v74 = vand.u32 %v26, 4294901760
    %75 = vmatpush.msra.mxu0 %v74
    %v76 = vand.u32 %v25, 4294901760
    %v77 = vsub.f32 %v25, %v76
    %v78 = vand.u32 %v77, 4294901760
    %v79 = vsub.f32 %v77, %v78
    %v80 = vand.u32 %v79, 4294901760
    %81 = vmatmul.f32.gmra.mxu0 %v80
    %v82 = vpop.f32.mrf.mxu0
    %v83 = vadd.f32 %v43, %v82
    %84 = vdwg.mxu0
    %v85 = vand.u32 %v41, 4294901760
    %v86 = vsub.f32 %v41, %v85
    %v87 = vand.u32 %v86, 4294901760
    %v88 = vsub.f32 %v86, %v87
    %v89 = vand.u32 %v88, 4294901760
    %90 = vmatpush.msra.mxu0 %v89
    %v91 = vand.u32 %v40, 4294901760
    %v92 = vsub.f32 %v40, %v91
    %v93 = vand.u32 %v92, 4294901760
    %v94 = vsub.f32 %v92, %v93
    %v95 = vand.u32 %v94, 4294901760
    %96 = vmatpush.msra.mxu0 %v95
    %v97 = vand.u32 %v39, 4294901760
    %v98 = vsub.f32 %v39, %v97
    %v99 = vand.u32 %v98, 4294901760
    %v100 = vsub.f32 %v98, %v99
    %v101 = vand.u32 %v100, 4294901760
    %102 = vmatpush.msra.mxu0 %v101
    %v103 = vand.u32 %v38, 4294901760
    %v104 = vsub.f32 %v38, %v103
    %v105 = vand.u32 %v104, 4294901760
    %v106 = vsub.f32 %v104, %v105
    %v107 = vand.u32 %v106, 4294901760
    %108 = vmatpush.msra.mxu0 %v107
    %v109 = vand.u32 %v37, 4294901760
    %v110 = vsub.f32 %v37, %v109
    %v111 = vand.u32 %v110, 4294901760
    %v112 = vsub.f32 %v110, %v111
    %v113 = vand.u32 %v112, 4294901760
    %114 = vmatpush.msra.mxu0 %v113
    %v115 = vand.u32 %v36, 4294901760
    %v116 = vsub.f32 %v36, %v115
    %v117 = vand.u32 %v116, 4294901760
    %v118 = vsub.f32 %v116, %v117
    %v119 = vand.u32 %v118, 4294901760
    %120 = vmatpush.msra.mxu0 %v119
    %v121 = vand.u32 %v35, 4294901760
    %v122 = vsub.f32 %v35, %v121
    %v123 = vand.u32 %v122, 4294901760
    %v124 = vsub.f32 %v122, %v123
    %v125 = vand.u32 %v124, 4294901760
    %126 = vmatpush.msra.mxu0 %v125
    %v127 = vand.u32 %v34, 4294901760
    %v128 = vsub.f32 %v34, %v127
    %v129 = vand.u32 %v128, 4294901760
    %v130 = vsub.f32 %v128, %v129
    %v131 = vand.u32 %v130, 4294901760
    %132 = vmatpush.msra.mxu0 %v131
    %v133 = vand.u32 %v33, 4294901760
    %v134 = vsub.f32 %v33, %v133
    %v135 = vand.u32 %v134, 4294901760
    %v136 = vsub.f32 %v134, %v135
    %v137 = vand.u32 %v136, 4294901760
    %138 = vmatpush.msra.mxu0 %v137
    %v139 = vand.u32 %v32, 4294901760
    %v140 = vsub.f32 %v32, %v139
    %v141 = vand.u32 %v140, 4294901760
    %v142 = vsub.f32 %v140, %v141
    %v143 = vand.u32 %v142, 4294901760
    %144 = vmatpush.msra.mxu0 %v143
    %v145 = vand.u32 %v31, 4294901760
    %v146 = vsub.f32 %v31, %v145
    %v147 = vand.u32 %v146, 4294901760
    %v148 = vsub.f32 %v146, %v147
    %v149 = vand.u32 %v148, 4294901760
    %150 = vmatpush.msra.mxu0 %v149
    %v151 = vand.u32 %v30, 4294901760
    %v152 = vsub.f32 %v30, %v151
    %v153 = vand.u32 %v152, 4294901760
    %v154 = vsub.f32 %v152, %v153
    %v155 = vand.u32 %v154, 4294901760
    %156 = vmatpush.msra.mxu0 %v155
    %v157 = vand.u32 %v29, 4294901760
    %v158 = vsub.f32 %v29, %v157
    %v159 = vand.u32 %v158, 4294901760
    %v160 = vsub.f32 %v158, %v159
    %v161 = vand.u32 %v160, 4294901760
    %162 = vmatpush.msra.mxu0 %v161
    %v163 = vand.u32 %v28, 4294901760
    %v164 = vsub.f32 %v28, %v163
    %v165 = vand.u32 %v164, 4294901760
    %v166 = vsub.f32 %v164, %v165
    %v167 = vand.u32 %v166, 4294901760
    %168 = vmatpush.msra.mxu0 %v167
    %v169 = vand.u32 %v27, 4294901760
    %v170 = vsub.f32 %v27, %v169
    %v171 = vand.u32 %v170, 4294901760
    %v172 = vsub.f32 %v170, %v171
    %v173 = vand.u32 %v172, 4294901760
    %174 = vmatpush.msra.mxu0 %v173
    %v175 = vand.u32 %v26, 4294901760
    %v176 = vsub.f32 %v26, %v175
    %v177 = vand.u32 %v176, 4294901760
    %v178 = vsub.f32 %v176, %v177
    %v179 = vand.u32 %v178, 4294901760
    %180 = vmatpush.msra.mxu0 %v179
    %v181 = vand.u32 %v25, 4294901760
    %182 = vmatmul.f32.gmra.mxu0 %v181
    %v183 = vpop.f32.mrf.mxu0
    %v184 = vadd.f32 %v83, %v183
    %185 = vdwg.mxu0
    %v186 = vand.u32 %v41, 4294901760
    %v187 = vsub.f32 %v41, %v186
    %188 = vmatpush.msra.mxu0 %v187
    %v189 = vand.u32 %v40, 4294901760
    %v190 = vsub.f32 %v40, %v189
    %191 = vmatpush.msra.mxu0 %v190
    %v192 = vand.u32 %v39, 4294901760
    %v193 = vsub.f32 %v39, %v192
    %194 = vmatpush.msra.mxu0 %v193
    %v195 = vand.u32 %v38, 4294901760
    %v196 = vsub.f32 %v38, %v195
    %197 = vmatpush.msra.mxu0 %v196
    %v198 = vand.u32 %v37, 4294901760
    %v199 = vsub.f32 %v37, %v198
    %200 = vmatpush.msra.mxu0 %v199
    %v201 = vand.u32 %v36, 4294901760
    %v202 = vsub.f32 %v36, %v201
    %203 = vmatpush.msra.mxu0 %v202
    %v204 = vand.u32 %v35, 4294901760
    %v205 = vsub.f32 %v35, %v204
    %206 = vmatpush.msra.mxu0 %v205
    %v207 = vand.u32 %v34, 4294901760
    %v208 = vsub.f32 %v34, %v207
    %209 = vmatpush.msra.mxu0 %v208
    %v210 = vand.u32 %v33, 4294901760
    %v211 = vsub.f32 %v33, %v210
    %212 = vmatpush.msra.mxu0 %v211
    %v213 = vand.u32 %v32, 4294901760
    %v214 = vsub.f32 %v32, %v213
    %215 = vmatpush.msra.mxu0 %v214
    %v216 = vand.u32 %v31, 4294901760
    %v217 = vsub.f32 %v31, %v216
    %218 = vmatpush.msra.mxu0 %v217
    %v219 = vand.u32 %v30, 4294901760
    %v220 = vsub.f32 %v30, %v219
    %221 = vmatpush.msra.mxu0 %v220
    %v222 = vand.u32 %v29, 4294901760
    %v223 = vsub.f32 %v29, %v222
    %224 = vmatpush.msra.mxu0 %v223
    %v225 = vand.u32 %v28, 4294901760
    %v226 = vsub.f32 %v28, %v225
    %227 = vmatpush.msra.mxu0 %v226
    %v228 = vand.u32 %v27, 4294901760
    %v229 = vsub.f32 %v27, %v228
    %230 = vmatpush.msra.mxu0 %v229
    %v231 = vand.u32 %v26, 4294901760
    %v232 = vsub.f32 %v26, %v231
    %233 = vmatpush.msra.mxu0 %v232
    %v234 = vand.u32 %v25, 4294901760
    %v235 = vsub.f32 %v25, %v234
    %236 = vmatmul.f32.gmra.mxu0 %v235
    %v237 = vpop.f32.mrf.mxu0
    %v238 = vadd.f32 %v184, %v237
    %239 = vdwg.mxu0
    %v240 = vand.u32 %v41, 4294901760
    %241 = vmatpush.msra.mxu0 %v240
    %v242 = vand.u32 %v40, 4294901760
    %243 = vmatpush.msra.mxu0 %v242
    %v244 = vand.u32 %v39, 4294901760
    %245 = vmatpush.msra.mxu0 %v244
    %v246 = vand.u32 %v38, 4294901760
    %247 = vmatpush.msra.mxu0 %v246
    %v248 = vand.u32 %v37, 4294901760
    %249 = vmatpush.msra.mxu0 %v248
    %v250 = vand.u32 %v36, 4294901760
    %251 = vmatpush.msra.mxu0 %v250
    %v252 = vand.u32 %v35, 4294901760
    %253 = vmatpush.msra.mxu0 %v252
    %v254 = vand.u32 %v34, 4294901760
    %255 = vmatpush.msra.mxu0 %v254
    %v256 = vand.u32 %v33, 4294901760
    %257 = vmatpush.msra.mxu0 %v256
    %v258 = vand.u32 %v32, 4294901760
    %259 = vmatpush.msra.mxu0 %v258
    %v260 = vand.u32 %v31, 4294901760
    %261 = vmatpush.msra.mxu0 %v260
    %v262 = vand.u32 %v30, 4294901760
    %263 = vmatpush.msra.mxu0 %v262
    %v264 = vand.u32 %v29, 4294901760
    %265 = vmatpush.msra.mxu0 %v264
    %v266 = vand.u32 %v28, 4294901760
    %267 = vmatpush.msra.mxu0 %v266
    %v268 = vand.u32 %v27, 4294901760
    %269 = vmatpush.msra.mxu0 %v268
    %v270 = vand.u32 %v26, 4294901760
    %271 = vmatpush.msra.mxu0 %v270
    %v272 = vand.u32 %v25, 4294901760
    %v273 = vsub.f32 %v25, %v272
    %v274 = vand.u32 %v273, 4294901760
    %275 = vmatmul.f32.gmra.mxu0 %v274
    %v276 = vpop.f32.mrf.mxu0
    %v277 = vadd.f32 %v238, %v276
    %278 = vdwg.mxu0
    %v279 = vand.u32 %v41, 4294901760
    %v280 = vsub.f32 %v41, %v279
    %v281 = vand.u32 %v280, 4294901760
    %282 = vmatpush.msra.mxu0 %v281
    %v283 = vand.u32 %v40, 4294901760
    %v284 = vsub.f32 %v40, %v283
    %v285 = vand.u32 %v284, 4294901760
    %286 = vmatpush.msra.mxu0 %v285
    %v287 = vand.u32 %v39, 4294901760
    %v288 = vsub.f32 %v39, %v287
    %v289 = vand.u32 %v288, 4294901760
    %290 = vmatpush.msra.mxu0 %v289
    %v291 = vand.u32 %v38, 4294901760
    %v292 = vsub.f32 %v38, %v291
    %v293 = vand.u32 %v292, 4294901760
    %294 = vmatpush.msra.mxu0 %v293
    %v295 = vand.u32 %v37, 4294901760
    %v296 = vsub.f32 %v37, %v295
    %v297 = vand.u32 %v296, 4294901760
    %298 = vmatpush.msra.mxu0 %v297
    %v299 = vand.u32 %v36, 4294901760
    %v300 = vsub.f32 %v36, %v299
    %v301 = vand.u32 %v300, 4294901760
    %302 = vmatpush.msra.mxu0 %v301
    %v303 = vand.u32 %v35, 4294901760
    %v304 = vsub.f32 %v35, %v303
    %v305 = vand.u32 %v304, 4294901760
    %306 = vmatpush.msra.mxu0 %v305
    %v307 = vand.u32 %v34, 4294901760
    %v308 = vsub.f32 %v34, %v307
    %v309 = vand.u32 %v308, 4294901760
    %310 = vmatpush.msra.mxu0 %v309
    %v311 = vand.u32 %v33, 4294901760
    %v312 = vsub.f32 %v33, %v311
    %v313 = vand.u32 %v312, 4294901760
    %314 = vmatpush.msra.mxu0 %v313
    %v315 = vand.u32 %v32, 4294901760
    %v316 = vsub.f32 %v32, %v315
    %v317 = vand.u32 %v316, 4294901760
    %318 = vmatpush.msra.mxu0 %v317
    %v319 = vand.u32 %v31, 4294901760
    %v320 = vsub.f32 %v31, %v319
    %v321 = vand.u32 %v320, 4294901760
    %322 = vmatpush.msra.mxu0 %v321
    %v323 = vand.u32 %v30, 4294901760
    %v324 = vsub.f32 %v30, %v323
    %v325 = vand.u32 %v324, 4294901760
    %326 = vmatpush.msra.mxu0 %v325
    %v327 = vand.u32 %v29, 4294901760
    %v328 = vsub.f32 %v29, %v327
    %v329 = vand.u32 %v328, 4294901760
    %330 = vmatpush.msra.mxu0 %v329
    %v331 = vand.u32 %v28, 4294901760
    %v332 = vsub.f32 %v28, %v331
    %v333 = vand.u32 %v332, 4294901760
    %334 = vmatpush.msra.mxu0 %v333
    %v335 = vand.u32 %v27, 4294901760
    %v336 = vsub.f32 %v27, %v335
    %v337 = vand.u32 %v336, 4294901760
    %338 = vmatpush.msra.mxu0 %v337
    %v339 = vand.u32 %v26, 4294901760
    %v340 = vsub.f32 %v26, %v339
    %v341 = vand.u32 %v340, 4294901760
    %342 = vmatpush.msra.mxu0 %v341
    %v343 = vand.u32 %v25, 4294901760
    %344 = vmatmul.f32.gmra.mxu0 %v343
    %v345 = vpop.f32.mrf.mxu0
    %v346 = vadd.f32 %v277, %v345
    %347 = vdwg.mxu0
    %v348 = vand.u32 %v41, 4294901760
    %349 = vmatpush.msra.mxu0 %v348
    %v350 = vand.u32 %v40, 4294901760
    %351 = vmatpush.msra.mxu0 %v350
    %v352 = vand.u32 %v39, 4294901760
    %353 = vmatpush.msra.mxu0 %v352
    %v354 = vand.u32 %v38, 4294901760
    %355 = vmatpush.msra.mxu0 %v354
    %v356 = vand.u32 %v37, 4294901760
    %357 = vmatpush.msra.mxu0 %v356
    %v358 = vand.u32 %v36, 4294901760
    %359 = vmatpush.msra.mxu0 %v358
    %v360 = vand.u32 %v35, 4294901760
    %361 = vmatpush.msra.mxu0 %v360
    %v362 = vand.u32 %v34, 4294901760
    %363 = vmatpush.msra.mxu0 %v362
    %v364 = vand.u32 %v33, 4294901760
    %365 = vmatpush.msra.mxu0 %v364
    %v366 = vand.u32 %v32, 4294901760
    %367 = vmatpush.msra.mxu0 %v366
    %v368 = vand.u32 %v31, 4294901760
    %369 = vmatpush.msra.mxu0 %v368
    %v370 = vand.u32 %v30, 4294901760
    %371 = vmatpush.msra.mxu0 %v370
    %v372 = vand.u32 %v29, 4294901760
    %373 = vmatpush.msra.mxu0 %v372
    %v374 = vand.u32 %v28, 4294901760
    %375 = vmatpush.msra.mxu0 %v374
    %v376 = vand.u32 %v27, 4294901760
    %377 = vmatpush.msra.mxu0 %v376
    %v378 = vand.u32 %v26, 4294901760
    %379 = vmatpush.msra.mxu0 %v378
    %v380 = vand.u32 %v25, 4294901760
    %381 = vmatmul.f32.gmra.mxu0 %v380
    %v382 = vpop.f32.mrf.mxu0
    %v383 = vadd.f32 %v346, %v382
    %384 = vdwg.mxu0
    %v385 = vsub.f32 0.0, %v383
    %v386 = vmul.f32 %v385, 1.442695
    %v387 = vpow.pop %v386
    %v388 = vadd.f32 %v387, 1.0
    %v389 = vrcp.pop %v388
    %v390 = vmul.f32 %v388, %v389
    %v391 = vsub.f32 1.0, %v390
    %v392 = vmul.f32 %v389, %v391
    %v393 = vadd.f32 %v389, %v392
    %vm394 = vweird.f32 %v388
    %vm395 = vweird.f32 %v389
    %vm396 = vmor %vm394, %vm395
    %v397 = vsel %vm396, %v389, %v393
    %v398 = vand.u32 2147483647, %v388
    %vm399 = vcmp.eq.f32.partialorder %v398, 8.507059e+37
    %v400 = vand.u32 %v388, 2147483648
    %v401 = vor.u32 1.1754944e-38, %v400
    %v402 = vsel %vm399, %v401, %v397
    %v403 = vmul.f32 1.0, %v402
    %vm404 = vcmask 123904
    %405 = vst.msk [vmem:[#allocation3] sm:$0x3] %vm404, %v403
    // Predicated region
    $region14: #{tpu_custom_call.1} parent=1 // pred_check
      _
    $region15: #{tpu_custom_call.1} parent=1 // pred_check_branch
      %407 = sbr.rel (0) target = $region17
    $region16: #{tpu_custom_call.1} parent=1 // pred_region
      %409 = vsyncadd [#allocation4], 0
      %s411 = sshll.u32 [#allocation3], 4
      %s412 = int_to_ptr.vmem [resolvable:$true] %s411
      %s413 = sshll.u32 %s3, 4
      %s414 = int_to_ptr.hbm [resolvable:$true] %s413
      %416 = dma.vmem_to_hbm [thread:$0]  %s412, 32, %s414, [#allocation4]
    $region17: #{tpu_custom_call.1} parent=1 // pred_fallthru
      _
    // Predicated region
    $region18: #{tpu_custom_call.1} parent=1 // pred_check
      _
    $region19: #{tpu_custom_call.1} parent=1 // pred_check_branch
      %418 = sbr.rel (0) target = $region21
    $region20: #{tpu_custom_call.1} parent=1 // pred_region
      %420 = dma.done [#allocation4], 32
    $region21: #{tpu_custom_call.1} parent=1 // pred_fallthru
      _
    %421 = vsyncpa [#allocation4], 1

</llo_original>
